<compile_context>
chip_gen: v7x
topology: tpu7x:2x2x1
jax: 0.10.0
libtpu: 0.0.40
codegen_flags: <defaults>
</compile_context>

<pallas_src>
import functools

import jax
import jax.numpy as jnp
from jax.experimental import pallas as pl
from jax.experimental.pallas import tpu as pltpu


# ---------------------------------------------------------------------------
# VMEM budgeting (chip-aware, conservative for v7x's 64 MiB physical VMEM).
# ---------------------------------------------------------------------------
def _scoped_vmem_limit_bytes():
    try:
        cap = int(pltpu.get_tpu_info().vmem_capacity_bytes)
    except Exception:
        cap = 64 << 20          # assume v7x-sized VMEM if the query fails
    # Half of physical VMEM, capped at 64 MiB: 32 MiB on v7x, 64 MiB on v5e/v6e.
    return int(min(max(cap // 2, 16 << 20), 64 << 20))


def _pick_lane_tile(hw, c, itemsize, max_block_bytes):
    """Largest multiple of 128 dividing hw (hw must be 128-aligned), sized so
    one (1, c, tile) input block stays within max_block_bytes (dtype-aware)."""
    assert hw % 128 == 0
    per_col = max(itemsize * max(c, 1), 1)
    cap = max(128, (max_block_bytes // per_col) // 128 * 128)
    t = min(hw, cap)
    t = max(128, (t // 128) * 128)
    while hw % t != 0:
        t -= 128
    return t


# ---------------------------------------------------------------------------
# Kernels
# ---------------------------------------------------------------------------
def _bn_reduce_kernel(x_ref, acc_ref):
    """Pass 1: lane-dense per-(sample, hw-chunk) partial sums / sums of squares.

    x_ref:   (1, C, THW) input tile (THW a multiple of 128).
    acc_ref: (1, 1, 2*C, 128) f32 accumulator, VMEM-resident across the
             innermost ('arbitrary') grid axis; rows [0:C]=sum, [C:2C]=sum(x^2).
    """
    c = x_ref.shape[1]

    @pl.when(pl.program_id(2) == 0)
    def _():
        acc_ref[...] = jnp.zeros_like(acc_ref)

    x = x_ref[0].astype(jnp.float32)                       # (C, THW)
    xr = x.reshape(c, x.shape[1] // 128, 128)              # (C, T, 128)
    acc_ref[0, 0, :c, :] += jnp.sum(xr, axis=1)            # (C, 128) VPU adds
    acc_ref[0, 0, c:, :] += jnp.sum(xr * xr, axis=1)


def _bn_apply_kernel(x_ref, scale_ref, shift_ref, out_ref):
    """Pass 2: streaming out = x * scale + shift (per-channel affine)."""
    x = x_ref[...].astype(jnp.float32)                     # (1, C, THW)
    scale = scale_ref[...][None]                           # (1, C, 1)
    shift = shift_ref[...][None]
    out_ref[...] = (x * scale + shift).astype(out_ref.dtype)


def _bn_fused_kernel(x_ref, w_ref, b_ref, out_ref, mean_ref, var_ref, *,
                     eps, inv_count):
    """Fused fast path: x resident in VMEM; exact mean / mean((x-mean)^2)
    (mmcv numerics), normalize from the resident copy, single HBM read+write."""
    x = x_ref[...].astype(jnp.float32)                     # (N, C, HW)
    s = jnp.sum(jnp.sum(x, axis=2, keepdims=True), axis=0, keepdims=True)
    mean = s * inv_count                                   # (1, C, 1)
    xc = x - mean
    v = jnp.sum(jnp.sum(xc * xc, axis=2, keepdims=True), axis=0, keepdims=True)
    var = v * inv_count                                    # (1, C, 1)
    inv_std = jax.lax.rsqrt(var + eps)
    w = w_ref[...].astype(jnp.float32)[None]               # (1, C, 1)
    b = b_ref[...].astype(jnp.float32)[None]
    out_ref[...] = (xc * (inv_std * w) + b).astype(out_ref.dtype)
    mean_ref[...] = mean[0]                                # (C, 1)
    var_ref[...] = var[0]


# ---------------------------------------------------------------------------
# Forward wrapper
# ---------------------------------------------------------------------------
def sync_batch_norm_forward(x, weight, bias, running_mean, running_var,
                            eps=1e-5, momentum=0.1, force_streaming=False):
    """mmcv SyncBatchNorm forward (training, group_size=1, stats_mode='default').

    x: (N, C, H, W). Returns (out NCHW, new_running_mean, new_running_var).
    `force_streaming=True` bypasses the fused VMEM-resident fast path (testing).
    """
    n, c, h, w = x.shape
    hw = h * w
    count = float(n * hw)
    itemsize = x.dtype.itemsize

    x3 = x.reshape(n, c, hw)                    # free view, stays in NCHW order
    vmem_limit = _scoped_vmem_limit_bytes()

    use_fused = (not force_streaming) and (4 * n * c * hw <= vmem_limit // 4)

    if use_fused:
        # ---- fused fast path: 1 read + 1 write of x ------------------------
        out3, mean2, var2 = pl.pallas_call(
            functools.partial(_bn_fused_kernel, eps=float(eps),
                              inv_count=1.0 / count),
            out_shape=(jax.ShapeDtypeStruct((n, c, hw), x.dtype),
                       jax.ShapeDtypeStruct((c, 1), jnp.float32),
                       jax.ShapeDtypeStruct((c, 1), jnp.float32)),
            grid=(1,),
            in_specs=[pl.BlockSpec((n, c, hw), lambda i: (0, 0, 0)),
                      pl.BlockSpec((c, 1), lambda i: (0, 0)),
                      pl.BlockSpec((c, 1), lambda i: (0, 0))],
            out_specs=(pl.BlockSpec((n, c, hw), lambda i: (0, 0, 0)),
                       pl.BlockSpec((c, 1), lambda i: (0, 0)),
                       pl.BlockSpec((c, 1), lambda i: (0, 0))),
            compiler_params=pltpu.CompilerParams(vmem_limit_bytes=vmem_limit),
        )(x3,
          weight.astype(jnp.float32).reshape(c, 1),
          bias.astype(jnp.float32).reshape(c, 1))
        mean = mean2[:, 0]
        var = var2[:, 0]
    else:
        # ---- streaming path: 2 reads + 1 write of x ------------------------
        # Pad HW to a multiple of 128 so every lane tile is full/unmasked;
        # zero padding does not perturb sum/sumsq (we divide by the true
        # element count) and the padded output tail is cropped afterwards.
        hw_p = ((hw + 127) // 128) * 128
        x3p = x3 if hw_p == hw else jnp.pad(
            x3, ((0, 0), (0, 0), (0, hw_p - hw)))

        # Pass 1: only its input is double-buffered -> ~2x the pass-2 tile.
        thw1 = _pick_lane_tile(hw_p, c, itemsize, vmem_limit // 8)
        num_t = hw_p // thw1
        # Split HW-tile axis into (parallel chunks, arbitrary inner) so both
        # TensorCores stream pass 1 even when per-device N is 1-2 (v7x).
        p_split = 2 if (num_t >= 2 and num_t % 2 == 0) else 1
        inner_t = num_t // p_split

        acc = pl.pallas_call(
            _bn_reduce_kernel,
            out_shape=jax.ShapeDtypeStruct((n, p_split, 2 * c, 128),
                                           jnp.float32),
            grid=(n, p_split, inner_t),
            in_specs=[pl.BlockSpec(
                (1, c, thw1), lambda i, p, t: (i, 0, p * inner_t + t))],
            out_specs=pl.BlockSpec(
                (1, 1, 2 * c, 128), lambda i, p, t: (i, p, 0, 0)),
            compiler_params=pltpu.CompilerParams(
                dimension_semantics=("parallel", "parallel", "arbitrary"),
                vmem_limit_bytes=vmem_limit),
        )(x3p)

        # Tiny glue: fold lane-dense partials into per-channel mean / biased var.
        sums = jnp.sum(acc, axis=(0, 1, 3))                 # (2*C,)
        mean = sums[:c] / count
        # TODO(synk): E[x^2]-mean^2 in f32 can cancel for |mean| >> std; an
        # exact second stats pass (as mmcv does) would cost one more read of x.
        var = jnp.maximum(sums[c:] / count - mean * mean, 0.0)

        inv_std = jax.lax.rsqrt(var + jnp.float32(eps))
        scale = weight.astype(jnp.float32) * inv_std        # (C,)
        shift = bias.astype(jnp.float32) - mean * scale     # (C,)

        # Pass 2: in + out double-buffered -> smaller tile budget.
        thw2 = _pick_lane_tile(hw_p, c, itemsize, vmem_limit // 16)
        num_t2 = hw_p // thw2
        out3p = pl.pallas_call(
            _bn_apply_kernel,
            out_shape=jax.ShapeDtypeStruct((n, c, hw_p), x.dtype),
            grid=(n, num_t2),
            in_specs=[
                pl.BlockSpec((1, c, thw2), lambda i, t: (i, 0, t)),
                pl.BlockSpec((c, 1), lambda i, t: (0, 0)),
                pl.BlockSpec((c, 1), lambda i, t: (0, 0)),
            ],
            out_specs=pl.BlockSpec((1, c, thw2), lambda i, t: (i, 0, t)),
            compiler_params=pltpu.CompilerParams(
                dimension_semantics=("parallel", "parallel"),
                vmem_limit_bytes=vmem_limit),
        )(x3p, scale.reshape(c, 1), shift.reshape(c, 1))
        out3 = out3p if hw_p == hw else out3p[:, :, :hw]

    out = out3.reshape(n, c, h, w)              # free view back to NCHW

    # TODO(synk): when C % 8 != 0 a flattened (N*C, HW) layout would fill the
    # sublanes better; for typical C (>=8 and multiples of 8) current layout
    # is already dense.

    # ---- running-stat update (mirrors sync_bn_forward_output) -------------
    # batch_size > 0 -> update_flag == 1, effective momentum == momentum;
    # running_var gets the unbiased estimate var * M / (M - 1).
    # TODO(synk): M == 1 keeps the biased estimate (mmcv would divide by 0).
    unbiased_var = var * (count / max(count - 1.0, 1.0))
    new_running_mean = (1.0 - momentum) * running_mean + momentum * mean
    new_running_var = (1.0 - momentum) * running_var + momentum * unbiased_var

    return out, new_running_mean, new_running_var


if __name__ == "__main__":
    key = jax.random.PRNGKey(0)
    k_x, k_w = jax.random.split(key)

    N, C, H, W = 2, 4, 16, 16
    eps, momentum = 1e-5, 0.1

    x = jax.random.normal(k_x, (N, C, H, W), dtype=jnp.float32)

    # Deterministic init matching SyncBatchNorm.reset_parameters():
    #   weight ~ U[0,1), bias = 0, running_mean = 0, running_var = 1
    weight = jax.random.uniform(k_w, (C,), dtype=jnp.float32)
    bias = jnp.zeros((C,), dtype=jnp.float32)
    running_mean = jnp.zeros((C,), dtype=jnp.float32)
    running_var = jnp.ones((C,), dtype=jnp.float32)

    def ref_forward(x, weight, bias, running_mean, running_var):
        mean = jnp.mean(x, axis=(0, 2, 3))
        var = jnp.mean((x - mean[None, :, None, None]) ** 2, axis=(0, 2, 3))
        out = ((x - mean[None, :, None, None])
               / jnp.sqrt(var[None, :, None, None] + eps)
               * weight[None, :, None, None] + bias[None, :, None, None])
        m_cnt = x.shape[0] * x.shape[2] * x.shape[3]
        unb = var * m_cnt / max(m_cnt - 1, 1)
        return (out,
                (1 - momentum) * running_mean + momentum * mean,
                (1 - momentum) * running_var + momentum * unb)

    def check(args, force_streaming, tag):
        got = sync_batch_norm_forward(*args, eps=eps, momentum=momentum,
                                      force_streaming=force_streaming)
        jax.block_until_ready(got)
        want = ref_forward(*args)
        names = ("out", "running_mean", "running_var")
        for g, r, name in zip(got, want, names):
            assert jnp.allclose(g, r, atol=2e-4, rtol=2e-4), \
                f"{tag}: {name} mismatch"

    args = (x, weight, bias, running_mean, running_var)
    check(args, force_streaming=False, tag="fused")       # fused VMEM path
    check(args, force_streaming=True, tag="streaming")    # 2-pass streaming path

    # Non-128-divisible spatial size exercises the padding path.
    x_odd = jax.random.normal(k_x, (N, C, 10, 10), dtype=jnp.float32)
    check((x_odd, weight, bias, running_mean, running_var),
          force_streaming=True, tag="streaming-padded")

    # TODO(synk): multi-worker dist.all_reduce of mean/var (group_size > 1),
    # stats_mode='N' and the empty-batch update_flag path are not modeled;
    # single-device group_size=1 training path only.
    print("KERNEL_OK")
</pallas_src>

<mosaic_0001>
module attributes {stable_mosaic.version = 11 : i64} {
  func.func @_bn_fused_kernel(%arg0: i32, %arg1: memref<2x4x256xf32, #tpu.memory_space<vmem>>, %arg2: memref<4x1xf32, #tpu.memory_space<vmem>>, %arg3: memref<4x1xf32, #tpu.memory_space<vmem>>, %arg4: memref<2x4x256xf32, #tpu.memory_space<vmem>>, %arg5: memref<4x1xf32, #tpu.memory_space<vmem>>, %arg6: memref<4x1xf32, #tpu.memory_space<vmem>>) attributes {dimension_semantics = [#tpu.dimension_semantics<arbitrary>], iteration_bounds = array<i64: 1>, scalar_prefetch = 0 : i64, scratch_operands = 0 : i64, tpu.core_type = #tpu.core_type<tc>, window_params = [{pipeline_mode = #tpu.pipeline_mode<synchronous>, transform_indices = @transform_0, window_bounds = array<i64: 2, 4, 256>}, {pipeline_mode = #tpu.pipeline_mode<synchronous>, transform_indices = @transform_1, window_bounds = array<i64: 4, 1>}, {pipeline_mode = #tpu.pipeline_mode<synchronous>, transform_indices = @transform_2, window_bounds = array<i64: 4, 1>}, {pipeline_mode = #tpu.pipeline_mode<synchronous>, transform_indices = @transform_3, window_bounds = array<i64: 2, 4, 256>}, {pipeline_mode = #tpu.pipeline_mode<synchronous>, transform_indices = @transform_4, window_bounds = array<i64: 4, 1>}, {pipeline_mode = #tpu.pipeline_mode<synchronous>, transform_indices = @transform_5, window_bounds = array<i64: 4, 1>}]} {
    %c0 = arith.constant 0 : index
    %c0_0 = arith.constant 0 : index
    %c0_1 = arith.constant 0 : index
    %0 = vector.load %arg1[%c0, %c0_0, %c0_1] : memref<2x4x256xf32, #tpu.memory_space<vmem>>, vector<2x4x256xf32>
    %cst = arith.constant dense<0.000000e+00> : vector<2x4xf32>
    %1 = vector.multi_reduction <add>, %0, %cst [2] : vector<2x4x256xf32> to vector<2x4xf32>
    %2 = vector.shape_cast %1 : vector<2x4xf32> to vector<2x4x1xf32>
    %cst_2 = arith.constant dense<0.000000e+00> : vector<4x1xf32>
    %3 = vector.multi_reduction <add>, %2, %cst_2 [0] : vector<2x4x1xf32> to vector<4x1xf32>
    %4 = vector.shape_cast %3 : vector<4x1xf32> to vector<1x4x1xf32>
    %cst_3 = arith.constant 0.001953125 : f32
    %5 = vector.broadcast %cst_3 : f32 to vector<1x4x1xf32>
    %6 = arith.mulf %4, %5 : vector<1x4x1xf32>
    %7 = vector.broadcast %6 : vector<1x4x1xf32> to vector<2x4x256xf32>
    %8 = arith.subf %0, %7 : vector<2x4x256xf32>
    %9 = arith.mulf %8, %8 : vector<2x4x256xf32>
    %cst_4 = arith.constant dense<0.000000e+00> : vector<2x4xf32>
    %10 = vector.multi_reduction <add>, %9, %cst_4 [2] : vector<2x4x256xf32> to vector<2x4xf32>
    %11 = vector.shape_cast %10 : vector<2x4xf32> to vector<2x4x1xf32>
    %cst_5 = arith.constant dense<0.000000e+00> : vector<4x1xf32>
    %12 = vector.multi_reduction <add>, %11, %cst_5 [0] : vector<2x4x1xf32> to vector<4x1xf32>
    %13 = vector.shape_cast %12 : vector<4x1xf32> to vector<1x4x1xf32>
    %cst_6 = arith.constant 0.001953125 : f32
    %14 = vector.broadcast %cst_6 : f32 to vector<1x4x1xf32>
    %15 = arith.mulf %13, %14 : vector<1x4x1xf32>
    %cst_7 = arith.constant 9.99999974E-6 : f32
    %16 = vector.broadcast %cst_7 : f32 to vector<1x4x1xf32>
    %17 = arith.addf %15, %16 : vector<1x4x1xf32>
    %18 = math.rsqrt %17 : vector<1x4x1xf32>
    %c0_8 = arith.constant 0 : index
    %c0_9 = arith.constant 0 : index
    %19 = vector.load %arg2[%c0_8, %c0_9] : memref<4x1xf32, #tpu.memory_space<vmem>>, vector<4x1xf32>
    %20 = vector.shape_cast %19 : vector<4x1xf32> to vector<1x4x1xf32>
    %c0_10 = arith.constant 0 : index
    %c0_11 = arith.constant 0 : index
    %21 = vector.load %arg3[%c0_10, %c0_11] : memref<4x1xf32, #tpu.memory_space<vmem>>, vector<4x1xf32>
    %22 = vector.shape_cast %21 : vector<4x1xf32> to vector<1x4x1xf32>
    %23 = arith.mulf %18, %20 : vector<1x4x1xf32>
    %24 = vector.broadcast %23 : vector<1x4x1xf32> to vector<2x4x256xf32>
    %25 = arith.mulf %8, %24 : vector<2x4x256xf32>
    %26 = vector.broadcast %22 : vector<1x4x1xf32> to vector<2x4x256xf32>
    %27 = arith.addf %25, %26 : vector<2x4x256xf32>
    %c0_12 = arith.constant 0 : index
    %c0_13 = arith.constant 0 : index
    %c0_14 = arith.constant 0 : index
    %28 = vector.load %arg4[%c0_12, %c0_13, %c0_14] : memref<2x4x256xf32, #tpu.memory_space<vmem>>, vector<2x4x256xf32>
    tpu.vector_store %arg4[%c0_12, %c0_13, %c0_14], %27 {strides = array<i32>} : memref<2x4x256xf32, #tpu.memory_space<vmem>>, vector<2x4x256xf32>,
    %29 = vector.shape_cast %6 : vector<1x4x1xf32> to vector<4x1xf32>
    %c0_15 = arith.constant 0 : index
    %c0_16 = arith.constant 0 : index
    %30 = vector.load %arg5[%c0_15, %c0_16] : memref<4x1xf32, #tpu.memory_space<vmem>>, vector<4x1xf32>
    tpu.vector_store %arg5[%c0_15, %c0_16], %29 {strides = array<i32>} : memref<4x1xf32, #tpu.memory_space<vmem>>, vector<4x1xf32>,
    %31 = vector.shape_cast %15 : vector<1x4x1xf32> to vector<4x1xf32>
    %c0_17 = arith.constant 0 : index
    %c0_18 = arith.constant 0 : index
    %32 = vector.load %arg6[%c0_17, %c0_18] : memref<4x1xf32, #tpu.memory_space<vmem>>, vector<4x1xf32>
    tpu.vector_store %arg6[%c0_17, %c0_18], %31 {strides = array<i32>} : memref<4x1xf32, #tpu.memory_space<vmem>>, vector<4x1xf32>,
    return
  }
  func.func @transform_0(%arg0: i32) -> (i32, i32, i32) {
    %c0_i32 = arith.constant 0 : i32
    %c0_i32_0 = arith.constant 0 : i32
    %c0_i32_1 = arith.constant 0 : i32
    %c0_i32_2 = arith.constant 0 : i32
    return %c0_i32, %c0_i32_0, %c0_i32_1 : i32, i32, i32
  }
  func.func @transform_1(%arg0: i32) -> (i32, i32) {
    %c0_i32 = arith.constant 0 : i32
    %c0_i32_0 = arith.constant 0 : i32
    %c0_i32_1 = arith.constant 0 : i32
    return %c0_i32, %c0_i32_0 : i32, i32
  }
  func.func @transform_2(%arg0: i32) -> (i32, i32) {
    %c0_i32 = arith.constant 0 : i32
    %c0_i32_0 = arith.constant 0 : i32
    %c0_i32_1 = arith.constant 0 : i32
    return %c0_i32, %c0_i32_0 : i32, i32
  }
  func.func @transform_3(%arg0: i32) -> (i32, i32, i32) {
    %c0_i32 = arith.constant 0 : i32
    %c0_i32_0 = arith.constant 0 : i32
    %c0_i32_1 = arith.constant 0 : i32
    %c0_i32_2 = arith.constant 0 : i32
    return %c0_i32, %c0_i32_0, %c0_i32_1 : i32, i32, i32
  }
  func.func @transform_4(%arg0: i32) -> (i32, i32) {
    %c0_i32 = arith.constant 0 : i32
    %c0_i32_0 = arith.constant 0 : i32
    %c0_i32_1 = arith.constant 0 : i32
    return %c0_i32, %c0_i32_0 : i32, i32
  }
  func.func @transform_5(%arg0: i32) -> (i32, i32) {
    %c0_i32 = arith.constant 0 : i32
    %c0_i32_0 = arith.constant 0 : i32
    %c0_i32_1 = arith.constant 0 : i32
    return %c0_i32, %c0_i32_0 : i32, i32
  }
}

</mosaic_0001>

<llo_original>
// kernel: tpu_custom_call.1
$region0: #{tpu_custom_call.1}
  #allocation0 [shape = 'u32[]', space=smem, size = 0x4, offset = 0x4, fixed_abs, tag = 'smem constant byte address 0x4 - core index']
  #allocation1 [shape = 'u32[144,128]{1,0:T(1,128)}', space=vmem, size = 0x12000, scoped, tag = 'internal scratch']
  %s0 = inlined_call_operand.hbm [shape: f32[2,4,256], index: 0, kind: input, shape index: {}]
  %s1 = inlined_call_operand.vmem [shape: f32[4,1], index: 1, kind: input, shape index: {}]
  %s2 = inlined_call_operand.vmem [shape: f32[4,1], index: 2, kind: input, shape index: {}]
  %s3 = inlined_call_operand.hbm [shape: f32[2,4,256], index: 3, kind: output, shape index: {0}]
  %s4 = inlined_call_operand.vmem [shape: f32[4,1], index: 4, kind: output, shape index: {1}]
  %s5 = inlined_call_operand.vmem [shape: f32[4,1], index: 5, kind: output, shape index: {2}]
  %6 = xla_tuple %s3, %s4, %s5
  %s7 = sld [smem:[#allocation0]]
  $region42: #{tpu_custom_call.1} parent=0
    _
  %s9 = ssub.s32 1, %s7
  %s10 = scalar_select 0, %s9, %s7
  $region1: #{tpu_custom_call.1} parent=0
    #allocation2 [shape = 'u8[8192]{0}', space=vmem, size = 0x2000, scoped, tag = 'input window, operand 0, single buffered']
    #allocation3 [shape = 's32[1]{0}', space=sflag, size = 0x4, scoped, tag = 'scoped memory for tpu_custom_call.1']
    #allocation4 [shape = 's32[1]{0}', space=sflag, size = 0x4, scoped, tag = 'scoped memory for tpu_custom_call.1']
    #allocation5 [shape = 'u8[8192]{0}', space=vmem, size = 0x2000, scoped, tag = 'output window, operand 0, single buffered']
    %11 = vsyncpa [#allocation3], 0
    %12 = vsyncpa [#allocation4], 0
    // Predicated region
    $region2: #{tpu_custom_call.1} parent=1 // pred_check
      _
    $region3: #{tpu_custom_call.1} parent=1 // pred_check_branch
      %14 = sbr.rel (0) target = $region5
    $region4: #{tpu_custom_call.1} parent=1 // pred_region
      %s16 = ssub.s32 256, 256
      %17 = vsyncadd [#allocation3], %s16
      %s18 = sshll.u32 [#allocation2], 4
      %s19 = int_to_ptr.vmem [resolvable:$true] %s18
      %24 = dma.hbm_to_vmem [thread:$0]  %s0, 256, %s19, [#allocation3], 128, 128, 8
    $region5: #{tpu_custom_call.1} parent=1 // pred_fallthru
      _
    // Predicated region
    $region6: #{tpu_custom_call.1} parent=1 // pred_check
      _
    $region7: #{tpu_custom_call.1} parent=1 // pred_check_branch
      %26 = sbr.rel (0) target = $region9
    $region8: #{tpu_custom_call.1} parent=1 // pred_region
      _
    $region9: #{tpu_custom_call.1} parent=1 // pred_fallthru
      _
    // Predicated region
    $region10: #{tpu_custom_call.1} parent=1 // pred_check
      _
    $region11: #{tpu_custom_call.1} parent=1 // pred_check_branch
      %28 = sbr.rel (0) target = $region13
    $region12: #{tpu_custom_call.1} parent=1 // pred_region
      _
    $region13: #{tpu_custom_call.1} parent=1 // pred_fallthru
      _
    // Predicated region
    $region14: #{tpu_custom_call.1} parent=1 // pred_check
      _
    $region15: #{tpu_custom_call.1} parent=1 // pred_check_branch
      %30 = sbr.rel (0) target = $region17
    $region16: #{tpu_custom_call.1} parent=1 // pred_region
      %31 = dma.done [#allocation3], 256
    $region17: #{tpu_custom_call.1} parent=1 // pred_fallthru
      _
    %v32 = vld [vmem:[#allocation2] sm:$0xff]
    %v33 = vld [vmem:[#allocation2 + $0x8] sm:$0xff]
    %v36 = vcombine.high %v32, %v32
    %v37 = vcombine.high %v33, %v33
    %vm40 = vcmask 1043456
    %v41 = vsel %vm40, %v32, 0.0
    %v42 = vsel %vm40, %v36, 0.0
    %v43 = vadd.f32 %v41, %v42
    %44 = vadd.xlane.f32.xlu0 %v43
    %v45 = vpop.xlane.xlu0 %44
    %v46 = vsel %vm40, %v33, 0.0
    %v47 = vsel %vm40, %v37, 0.0
    %v48 = vadd.f32 %v46, %v47
    %49 = vadd.xlane.f32.xlu0 %v48
    %v50 = vpop.xlane.xlu0 %49
    %v51 = vsel %vm40, %v45, 0.0
    %v52 = vsel %vm40, %v50, 0.0
    %v53 = vadd.f32 %v51, %v52
    %v54 = vmul.f32 %v53, 0.001953125
    %v57 = vunpack.c.l.s4 839922192
    %v58 = vunpack.c.0.s8 %v57
    %v59 = vlaneseq
    %v60 = vshrl.u32 %v59, 7
    %v61 = vsub.s32 %v58, %v60
    %v62 = vrot.slane %v54, %v61
    %v64 = vsub.f32 %v32, %v62
    %v65 = vsub.f32 %v33, %v62
    %v66 = vmul.f32 %v64, %v64
    %v67 = vmul.f32 %v65, %v65
    %v70 = vcombine.high %v66, %v66
    %v71 = vcombine.high %v67, %v67
    %v74 = vsel %vm40, %v66, 0.0
    %v75 = vsel %vm40, %v70, 0.0
    %v76 = vadd.f32 %v74, %v75
    %77 = vadd.xlane.f32.xlu0 %v76
    %v78 = vpop.xlane.xlu0 %77
    %v79 = vsel %vm40, %v67, 0.0
    %v80 = vsel %vm40, %v71, 0.0
    %v81 = vadd.f32 %v79, %v80
    %82 = vadd.xlane.f32.xlu0 %v81
    %v83 = vpop.xlane.xlu0 %82
    %v84 = vsel %vm40, %v78, 0.0
    %v85 = vsel %vm40, %v83, 0.0
    %v86 = vadd.f32 %v84, %v85
    %v87 = vmul.f32 %v86, 0.001953125
    %v88 = vadd.f32 %v87, 1e-05
    %v89 = vrsqrt.pop %v88
    %v90 = vld [vmem:[%s1] sm:$0xf]
    %v91 = vld [vmem:[%s2] sm:$0xf]
    %v92 = vmul.f32 %v89, %v90
    %94 = vset.pattern.permute.xlu0 0
    %95 = vperm.xlu0 %94, %v92
    %v96 = vpop.permute.xlu0 %95
    %v98 = vunpack.c.l.s4 839922192
    %v99 = vunpack.c.0.s8 %v98
    %v100 = vlaneseq
    %v101 = vshrl.u32 %v100, 7
    %v102 = vsub.s32 %v99, %v101
    %v103 = vrot.slane %v96, %v102
    %v105 = vmul.f32 %v64, %v103
    %v106 = vmul.f32 %v65, %v103
    %108 = vset.pattern.permute.xlu0 0
    %109 = vperm.xlu0 %108, %v91
    %v110 = vpop.permute.xlu0 %109
    %v112 = vunpack.c.l.s4 839922192
    %v113 = vunpack.c.0.s8 %v112
    %v114 = vlaneseq
    %v115 = vshrl.u32 %v114, 7
    %v116 = vsub.s32 %v113, %v115
    %v117 = vrot.slane %v110, %v116
    %v119 = vadd.f32 %v105, %v117
    %v120 = vadd.f32 %v106, %v117
    %121 = vst [vmem:[#allocation5] sm:$0xff] %v119
    %122 = vst [vmem:[#allocation5 + $0x8] sm:$0xff] %v120
    %vm123 = vcmask 3072
    %124 = vst.msk [vmem:[%s4] sm:$0xf] %vm123, %v54
    %125 = vst.msk [vmem:[%s5] sm:$0xf] %vm123, %v87
    // Predicated region
    $region18: #{tpu_custom_call.1} parent=1 // pred_check
      _
    $region19: #{tpu_custom_call.1} parent=1 // pred_check_branch
      %127 = sbr.rel (0) target = $region21
    $region20: #{tpu_custom_call.1} parent=1 // pred_region
      %s129 = ssub.s32 256, 256
      %130 = vsyncadd [#allocation4], %s129
      %s131 = sshll.u32 [#allocation5], 4
      %s132 = int_to_ptr.vmem [resolvable:$true] %s131
      %137 = dma.vmem_to_hbm [thread:$0]  %s132, 256, %s3, [#allocation4], 128, 128, 8
    $region21: #{tpu_custom_call.1} parent=1 // pred_fallthru
      _
    // Predicated region
    $region22: #{tpu_custom_call.1} parent=1 // pred_check
      _
    $region23: #{tpu_custom_call.1} parent=1 // pred_check_branch
      %139 = sbr.rel (0) target = $region25
    $region24: #{tpu_custom_call.1} parent=1 // pred_region
      _
    $region25: #{tpu_custom_call.1} parent=1 // pred_fallthru
      _
    // Predicated region
    $region26: #{tpu_custom_call.1} parent=1 // pred_check
      _
    $region27: #{tpu_custom_call.1} parent=1 // pred_check_branch
      %141 = sbr.rel (0) target = $region29
    $region28: #{tpu_custom_call.1} parent=1 // pred_region
      _
    $region29: #{tpu_custom_call.1} parent=1 // pred_fallthru
      _
    // Predicated region
    $region30: #{tpu_custom_call.1} parent=1 // pred_check
      _
    $region31: #{tpu_custom_call.1} parent=1 // pred_check_branch
      %143 = sbr.rel (0) target = $region33
    $region32: #{tpu_custom_call.1} parent=1 // pred_region
      %144 = dma.done [#allocation4], 256
    $region33: #{tpu_custom_call.1} parent=1 // pred_fallthru
      _
    // Predicated region
    $region34: #{tpu_custom_call.1} parent=1 // pred_check
      _
    $region35: #{tpu_custom_call.1} parent=1 // pred_check_branch
      %146 = sbr.rel (0) target = $region37
    $region36: #{tpu_custom_call.1} parent=1 // pred_region
      _
    $region37: #{tpu_custom_call.1} parent=1 // pred_fallthru
      _
    // Predicated region
    $region38: #{tpu_custom_call.1} parent=1 // pred_check
      _
    $region39: #{tpu_custom_call.1} parent=1 // pred_check_branch
      %148 = sbr.rel (0) target = $region41
    $region40: #{tpu_custom_call.1} parent=1 // pred_region
      _
    $region41: #{tpu_custom_call.1} parent=1 // pred_fallthru
      _
    %149 = vsyncpa [#allocation3], 1
    %150 = vsyncpa [#allocation4], 1

</llo_original>
